<compile_context>
chip_gen: v7x
topology: tpu7x:2x2x1
jax: 0.10.0
libtpu: 0.0.40
codegen_flags: <defaults>
</compile_context>

<pallas_src>
import functools

import jax
import jax.numpy as jnp
from jax.experimental import pallas as pl
from jax.experimental.pallas import tpu as pltpu


def _round_up(a, b):
    return (a + b - 1) // b * b


def _vmem_capacity_bytes():
    """Per-core VMEM capacity; conservative fallback if the query is unavailable."""
    try:
        info = pltpu.get_tpu_info()
        cap = getattr(info, "vmem_capacity_bytes", None)
        if cap:
            return int(cap)
    except Exception:
        pass
    return 64 * 1024 * 1024  # smallest of v5e/v6e/v7x (v7x per-TC VMEM)


def _num_tensorcores():
    """TensorCores per JAX device (2 on v7x, 1 on v5e/v6e)."""
    try:
        kind = jax.devices()[0].device_kind.lower()
    except Exception:
        return 1
    if "v7" in kind or "7x" in kind:
        return 2
    return 1


def _circular_pad_kernel(x_ref, o_ref, *, pad, H, W):
    # x_ref: (TB, H*W) lane-dense; o_ref: (TB, Ho*Wo) lane-dense.
    tb = x_ref.shape[0]
    Wo = W + 2 * pad
    xf = x_ref[...]                                    # single full-block load
    zrows = jnp.zeros((tb, pad * Wo), dtype=xf.dtype)  # flattened zero H-pad rows

    # Build the whole padded tile on the lane axis with static slices only
    # (no in-kernel reshape needed); H is small and static, so the Python
    # loop is a cheap trace-time unroll.
    pieces = [zrows]
    for h in range(H):
        base = h * W
        pieces.append(xf[:, base + W - pad:base + W])  # left wrap  <- right edge
        pieces.append(xf[:, base:base + W])            # center row
        pieces.append(xf[:, base:base + pad])          # right wrap <- left edge
    pieces.append(zrows)

    # ONE dense, aligned, full-block store (no masked partial stores).
    o_ref[...] = jnp.concatenate(pieces, axis=-1)


def circular_padding(x, pad, *, _max_block_rows=None):
    """x: (N, C, H, W) -> (N, C, H+2*pad, W+2*pad). Matches CircularPadding.forward."""
    if pad == 0:
        return x
    N, C, H, W = x.shape
    assert 0 < pad <= W, "circular_padding requires 0 < pad <= W"
    Ho, Wo = H + 2 * pad, W + 2 * pad
    B, L, Lo = N * C, H * W, Ho * Wo
    dsize = jnp.dtype(x.dtype).itemsize
    sub = 8 * max(1, 4 // dsize)          # sublane tile: 8 f32 / 16 bf16 / 32 i8

    # --- tile sizing from the PADDED VMEM footprint (lane/sublane rounded) ---
    per_row_bytes = (_round_up(L, 128) + _round_up(Lo, 128)) * dsize
    vmem_limit = min(_vmem_capacity_bytes() * 3 // 4, 96 * 1024 * 1024)
    tile_budget = vmem_limit // 3          # 2x(in+out) double-buffer <= ~2/3 limit
    tb_budget = max(1, tile_budget // per_row_bytes)
    if _max_block_rows is not None:        # test hook: force small blocks
        tb_budget = min(tb_budget, _max_block_rows)

    num_steps = pl.cdiv(B, tb_budget)
    cores = _num_tensorcores()
    if cores > 1 and B >= 2 * cores * sub:
        # Keep every TensorCore fed, with >=2 steps/core for load balance.
        num_steps = max(num_steps, 2 * cores)
    num_steps = min(num_steps, B)

    TB = pl.cdiv(B, num_steps)
    if TB < B:
        TB = min(_round_up(TB, sub), B)    # sublane-align block rows
    grid = (pl.cdiv(B, TB),)

    # Lane-dense presentation: flatten each (n, c) slice into the lane axis.
    xf = x.reshape(B, L)

    out = pl.pallas_call(
        functools.partial(_circular_pad_kernel, pad=pad, H=H, W=W),
        out_shape=jax.ShapeDtypeStruct((B, Lo), x.dtype),
        grid=grid,
        in_specs=[pl.BlockSpec((TB, L), lambda i: (i, 0))],
        out_specs=pl.BlockSpec((TB, Lo), lambda i: (i, 0)),
        compiler_params=pltpu.CompilerParams(
            dimension_semantics=("parallel",),
            vmem_limit_bytes=int(vmem_limit)),
        cost_estimate=pl.CostEstimate(
            flops=0, transcendentals=0,
            bytes_accessed=B * (L + Lo) * dsize),
    )(xf)
    return out.reshape(N, C, Ho, Wo)


def _reference(x, pad):
    """Pure-JAX reference mirroring the PyTorch forward exactly."""
    if pad == 0:
        return x
    p = jnp.pad(x, ((0, 0), (0, 0), (pad, pad), (pad, pad)),
                mode="constant", constant_values=0)
    W = x.shape[-1]
    p = p.at[:, :, :, 0:pad].set(p[:, :, :, W:W + pad])       # = p[..., -2p:-p]
    p = p.at[:, :, :, -pad:].set(p[:, :, :, pad:2 * pad])
    return p


if __name__ == "__main__":
    key = jax.random.PRNGKey(0)

    # Main case: typical NCHW usage of the module.
    N, C, H, W = 2, 4, 16, 16
    pad = 2
    x = jax.random.normal(key, (N, C, H, W), dtype=jnp.float32)
    out = jax.block_until_ready(circular_padding(x, pad))
    ref = _reference(x, pad)
    assert out.shape == (N, C, H + 2 * pad, W + 2 * pad)
    assert jnp.array_equal(out, ref), "mismatch vs reference"

    # Ragged-grid case: B=20 rows, blocks capped at 8 rows -> partial last block.
    x2 = jax.random.normal(jax.random.PRNGKey(1), (5, 4, 8, 16), dtype=jnp.float32)
    out2 = jax.block_until_ready(circular_padding(x2, 3, _max_block_rows=8))
    ref2 = _reference(x2, 3)
    assert jnp.array_equal(out2, ref2), "mismatch vs reference (ragged)"

    # pad == 0 path (identity).
    out0 = jax.block_until_ready(circular_padding(x, 0))
    assert jnp.array_equal(out0, x)

    print("KERNEL_OK")
</pallas_src>

<mosaic_0001>
module attributes {stable_mosaic.version = 11 : i64} {
  func.func @_circular_pad_kernel(%arg0: i32, %arg1: memref<8x256xf32, #tpu.memory_space<vmem>>, %arg2: memref<8x400xf32, #tpu.memory_space<vmem>>) attributes {dimension_semantics = [#tpu.dimension_semantics<parallel>], iteration_bounds = array<i64: 1>, scalar_prefetch = 0 : i64, scratch_operands = 0 : i64, tpu.core_type = #tpu.core_type<tc>, window_params = [{transform_indices = @transform_0, window_bounds = array<i64: 8, 256>}, {transform_indices = @transform_1, window_bounds = array<i64: 8, 400>}]} {
    %c0 = arith.constant 0 : index
    %c0_0 = arith.constant 0 : index
    %0 = vector.load %arg1[%c0, %c0_0] : memref<8x256xf32, #tpu.memory_space<vmem>>, vector<8x256xf32>
    %cst = arith.constant 0.000000e+00 : f32
    %1 = vector.broadcast %cst : f32 to vector<8x40xf32>
    %2 = vector.extract_strided_slice %0 {offsets = [0, 14], sizes = [8, 2], strides = [1, 1]} : vector<8x256xf32> to vector<8x2xf32>
    %3 = vector.extract_strided_slice %0 {offsets = [0, 0], sizes = [8, 16], strides = [1, 1]} : vector<8x256xf32> to vector<8x16xf32>
    %4 = vector.extract_strided_slice %0 {offsets = [0, 0], sizes = [8, 2], strides = [1, 1]} : vector<8x256xf32> to vector<8x2xf32>
    %5 = vector.extract_strided_slice %0 {offsets = [0, 30], sizes = [8, 2], strides = [1, 1]} : vector<8x256xf32> to vector<8x2xf32>
    %6 = vector.extract_strided_slice %0 {offsets = [0, 16], sizes = [8, 16], strides = [1, 1]} : vector<8x256xf32> to vector<8x16xf32>
    %7 = vector.extract_strided_slice %0 {offsets = [0, 16], sizes = [8, 2], strides = [1, 1]} : vector<8x256xf32> to vector<8x2xf32>
    %8 = vector.extract_strided_slice %0 {offsets = [0, 46], sizes = [8, 2], strides = [1, 1]} : vector<8x256xf32> to vector<8x2xf32>
    %9 = vector.extract_strided_slice %0 {offsets = [0, 32], sizes = [8, 16], strides = [1, 1]} : vector<8x256xf32> to vector<8x16xf32>
    %10 = vector.extract_strided_slice %0 {offsets = [0, 32], sizes = [8, 2], strides = [1, 1]} : vector<8x256xf32> to vector<8x2xf32>
    %11 = vector.extract_strided_slice %0 {offsets = [0, 62], sizes = [8, 2], strides = [1, 1]} : vector<8x256xf32> to vector<8x2xf32>
    %12 = vector.extract_strided_slice %0 {offsets = [0, 48], sizes = [8, 16], strides = [1, 1]} : vector<8x256xf32> to vector<8x16xf32>
    %13 = vector.extract_strided_slice %0 {offsets = [0, 48], sizes = [8, 2], strides = [1, 1]} : vector<8x256xf32> to vector<8x2xf32>
    %14 = vector.extract_strided_slice %0 {offsets = [0, 78], sizes = [8, 2], strides = [1, 1]} : vector<8x256xf32> to vector<8x2xf32>
    %15 = vector.extract_strided_slice %0 {offsets = [0, 64], sizes = [8, 16], strides = [1, 1]} : vector<8x256xf32> to vector<8x16xf32>
    %16 = vector.extract_strided_slice %0 {offsets = [0, 64], sizes = [8, 2], strides = [1, 1]} : vector<8x256xf32> to vector<8x2xf32>
    %17 = vector.extract_strided_slice %0 {offsets = [0, 94], sizes = [8, 2], strides = [1, 1]} : vector<8x256xf32> to vector<8x2xf32>
    %18 = vector.extract_strided_slice %0 {offsets = [0, 80], sizes = [8, 16], strides = [1, 1]} : vector<8x256xf32> to vector<8x16xf32>
    %19 = vector.extract_strided_slice %0 {offsets = [0, 80], sizes = [8, 2], strides = [1, 1]} : vector<8x256xf32> to vector<8x2xf32>
    %20 = vector.extract_strided_slice %0 {offsets = [0, 110], sizes = [8, 2], strides = [1, 1]} : vector<8x256xf32> to vector<8x2xf32>
    %21 = vector.extract_strided_slice %0 {offsets = [0, 96], sizes = [8, 16], strides = [1, 1]} : vector<8x256xf32> to vector<8x16xf32>
    %22 = vector.extract_strided_slice %0 {offsets = [0, 96], sizes = [8, 2], strides = [1, 1]} : vector<8x256xf32> to vector<8x2xf32>
    %23 = vector.extract_strided_slice %0 {offsets = [0, 126], sizes = [8, 2], strides = [1, 1]} : vector<8x256xf32> to vector<8x2xf32>
    %24 = vector.extract_strided_slice %0 {offsets = [0, 112], sizes = [8, 16], strides = [1, 1]} : vector<8x256xf32> to vector<8x16xf32>
    %25 = vector.extract_strided_slice %0 {offsets = [0, 112], sizes = [8, 2], strides = [1, 1]} : vector<8x256xf32> to vector<8x2xf32>
    %26 = vector.extract_strided_slice %0 {offsets = [0, 142], sizes = [8, 2], strides = [1, 1]} : vector<8x256xf32> to vector<8x2xf32>
    %27 = vector.extract_strided_slice %0 {offsets = [0, 128], sizes = [8, 16], strides = [1, 1]} : vector<8x256xf32> to vector<8x16xf32>
    %28 = vector.extract_strided_slice %0 {offsets = [0, 128], sizes = [8, 2], strides = [1, 1]} : vector<8x256xf32> to vector<8x2xf32>
    %29 = vector.extract_strided_slice %0 {offsets = [0, 158], sizes = [8, 2], strides = [1, 1]} : vector<8x256xf32> to vector<8x2xf32>
    %30 = vector.extract_strided_slice %0 {offsets = [0, 144], sizes = [8, 16], strides = [1, 1]} : vector<8x256xf32> to vector<8x16xf32>
    %31 = vector.extract_strided_slice %0 {offsets = [0, 144], sizes = [8, 2], strides = [1, 1]} : vector<8x256xf32> to vector<8x2xf32>
    %32 = vector.extract_strided_slice %0 {offsets = [0, 174], sizes = [8, 2], strides = [1, 1]} : vector<8x256xf32> to vector<8x2xf32>
    %33 = vector.extract_strided_slice %0 {offsets = [0, 160], sizes = [8, 16], strides = [1, 1]} : vector<8x256xf32> to vector<8x16xf32>
    %34 = vector.extract_strided_slice %0 {offsets = [0, 160], sizes = [8, 2], strides = [1, 1]} : vector<8x256xf32> to vector<8x2xf32>
    %35 = vector.extract_strided_slice %0 {offsets = [0, 190], sizes = [8, 2], strides = [1, 1]} : vector<8x256xf32> to vector<8x2xf32>
    %36 = vector.extract_strided_slice %0 {offsets = [0, 176], sizes = [8, 16], strides = [1, 1]} : vector<8x256xf32> to vector<8x16xf32>
    %37 = vector.extract_strided_slice %0 {offsets = [0, 176], sizes = [8, 2], strides = [1, 1]} : vector<8x256xf32> to vector<8x2xf32>
    %38 = vector.extract_strided_slice %0 {offsets = [0, 206], sizes = [8, 2], strides = [1, 1]} : vector<8x256xf32> to vector<8x2xf32>
    %39 = vector.extract_strided_slice %0 {offsets = [0, 192], sizes = [8, 16], strides = [1, 1]} : vector<8x256xf32> to vector<8x16xf32>
    %40 = vector.extract_strided_slice %0 {offsets = [0, 192], sizes = [8, 2], strides = [1, 1]} : vector<8x256xf32> to vector<8x2xf32>
    %41 = vector.extract_strided_slice %0 {offsets = [0, 222], sizes = [8, 2], strides = [1, 1]} : vector<8x256xf32> to vector<8x2xf32>
    %42 = vector.extract_strided_slice %0 {offsets = [0, 208], sizes = [8, 16], strides = [1, 1]} : vector<8x256xf32> to vector<8x16xf32>
    %43 = vector.extract_strided_slice %0 {offsets = [0, 208], sizes = [8, 2], strides = [1, 1]} : vector<8x256xf32> to vector<8x2xf32>
    %44 = vector.extract_strided_slice %0 {offsets = [0, 238], sizes = [8, 2], strides = [1, 1]} : vector<8x256xf32> to vector<8x2xf32>
    %45 = vector.extract_strided_slice %0 {offsets = [0, 224], sizes = [8, 16], strides = [1, 1]} : vector<8x256xf32> to vector<8x16xf32>
    %46 = vector.extract_strided_slice %0 {offsets = [0, 224], sizes = [8, 2], strides = [1, 1]} : vector<8x256xf32> to vector<8x2xf32>
    %47 = vector.extract_strided_slice %0 {offsets = [0, 254], sizes = [8, 2], strides = [1, 1]} : vector<8x256xf32> to vector<8x2xf32>
    %48 = vector.extract_strided_slice %0 {offsets = [0, 240], sizes = [8, 16], strides = [1, 1]} : vector<8x256xf32> to vector<8x16xf32>
    %49 = vector.extract_strided_slice %0 {offsets = [0, 240], sizes = [8, 2], strides = [1, 1]} : vector<8x256xf32> to vector<8x2xf32>
    %50 = tpu.concatenate %1, %2, %3, %4, %5, %6, %7, %8, %9, %10, %11, %12, %13, %14, %15, %16 in 1 : vector<8x40xf32>, vector<8x2xf32>, vector<8x16xf32>, vector<8x2xf32>, vector<8x2xf32>, vector<8x16xf32>, vector<8x2xf32>, vector<8x2xf32>, vector<8x16xf32>, vector<8x2xf32>, vector<8x2xf32>, vector<8x16xf32>, vector<8x2xf32>, vector<8x2xf32>, vector<8x16xf32>, vector<8x2xf32> -> vector<8x140xf32>
    %51 = tpu.concatenate %17, %18, %19, %20, %21, %22, %23, %24, %25, %26, %27, %28, %29, %30, %31, %32 in 1 : vector<8x2xf32>, vector<8x16xf32>, vector<8x2xf32>, vector<8x2xf32>, vector<8x16xf32>, vector<8x2xf32>, vector<8x2xf32>, vector<8x16xf32>, vector<8x2xf32>, vector<8x2xf32>, vector<8x16xf32>, vector<8x2xf32>, vector<8x2xf32>, vector<8x16xf32>, vector<8x2xf32>, vector<8x2xf32> -> vector<8x102xf32>
    %52 = tpu.concatenate %33, %34, %35, %36, %37, %38, %39, %40, %41, %42, %43, %44, %45, %46, %47, %48 in 1 : vector<8x16xf32>, vector<8x2xf32>, vector<8x2xf32>, vector<8x16xf32>, vector<8x2xf32>, vector<8x2xf32>, vector<8x16xf32>, vector<8x2xf32>, vector<8x2xf32>, vector<8x16xf32>, vector<8x2xf32>, vector<8x2xf32>, vector<8x16xf32>, vector<8x2xf32>, vector<8x2xf32>, vector<8x16xf32> -> vector<8x116xf32>
    %53 = tpu.concatenate %49, %1 in 1 : vector<8x2xf32>, vector<8x40xf32> -> vector<8x42xf32>
    %54 = tpu.concatenate %50, %51, %52, %53 in 1 : vector<8x140xf32>, vector<8x102xf32>, vector<8x116xf32>, vector<8x42xf32> -> vector<8x400xf32>
    %c0_1 = arith.constant 0 : index
    %c0_2 = arith.constant 0 : index
    %55 = vector.load %arg2[%c0_1, %c0_2] : memref<8x400xf32, #tpu.memory_space<vmem>>, vector<8x400xf32>
    tpu.vector_store %arg2[%c0_1, %c0_2], %54 {strides = array<i32>} : memref<8x400xf32, #tpu.memory_space<vmem>>, vector<8x400xf32>,
    return
  }
  func.func @transform_0(%arg0: i32) -> (i32, i32) {
    %c0_i32 = arith.constant 0 : i32
    %c0_i32_0 = arith.constant 0 : i32
    return %arg0, %c0_i32 : i32, i32
  }
  func.func @transform_1(%arg0: i32) -> (i32, i32) {
    %c0_i32 = arith.constant 0 : i32
    %c0_i32_0 = arith.constant 0 : i32
    return %arg0, %c0_i32 : i32, i32
  }
}

</mosaic_0001>

<llo_original>
// kernel: tpu_custom_call.1
$region0: #{tpu_custom_call.1}
  #allocation0 [shape = 'u32[]', space=smem, size = 0x4, offset = 0x4, fixed_abs, tag = 'smem constant byte address 0x4 - core index']
  #allocation1 [shape = 'u32[144,128]{1,0:T(1,128)}', space=vmem, size = 0x12000, scoped, tag = 'internal scratch']
  %s0 = inlined_call_operand.hbm [shape: f32[8,256], index: 0, kind: input, shape index: {}]
  %s1 = inlined_call_operand.hbm [shape: f32[8,400], index: 1, kind: output, shape index: {}]
  %s2 = sld [smem:[#allocation0]]
  $region18: #{tpu_custom_call.1} parent=0
    _
  %s4 = ssub.s32 1, %s2
  %s5 = scalar_select 0, %s4, %s2
  $region1: #{tpu_custom_call.1} parent=0
    #allocation2 [shape = 'u8[8192]{0}', space=vmem, size = 0x2000, scoped, tag = 'input window, operand 0, single buffered']
    #allocation3 [shape = 's32[1]{0}', space=sflag, size = 0x4, scoped, tag = 'scoped memory for tpu_custom_call.1']
    #allocation4 [shape = 's32[1]{0}', space=sflag, size = 0x4, scoped, tag = 'scoped memory for tpu_custom_call.1']
    #allocation5 [shape = 'u8[16384]{0}', space=vmem, size = 0x4000, scoped, tag = 'output window, operand 0, single buffered']
    %6 = vsyncpa [#allocation3], 0
    %7 = vsyncpa [#allocation4], 0
    // Predicated region
    $region2: #{tpu_custom_call.1} parent=1 // pred_check
      _
    $region3: #{tpu_custom_call.1} parent=1 // pred_check_branch
      %9 = sbr.rel (0) target = $region5
    $region4: #{tpu_custom_call.1} parent=1 // pred_region
      %s11 = ssub.s32 256, 256
      %12 = vsyncadd [#allocation3], %s11
      %s14 = sshll.u32 [#allocation2], 4
      %s15 = int_to_ptr.vmem [resolvable:$true] %s14
      %17 = dma.hbm_to_vmem [thread:$0]  %s0, 256, %s15, [#allocation3]
    $region5: #{tpu_custom_call.1} parent=1 // pred_fallthru
      _
    // Predicated region
    $region6: #{tpu_custom_call.1} parent=1 // pred_check
      _
    $region7: #{tpu_custom_call.1} parent=1 // pred_check_branch
      %19 = sbr.rel (0) target = $region9
    $region8: #{tpu_custom_call.1} parent=1 // pred_region
      %20 = dma.done [#allocation3], 256
    $region9: #{tpu_custom_call.1} parent=1 // pred_fallthru
      _
    %v21 = vld [vmem:[#allocation2] sm:$0xff]
    %v22 = vld [vmem:[#allocation2 + $0x8] sm:$0xff]
    %24 = vrot.lane.b32.xlu0 %v21, 26
    %v25 = vpop.permute.xlu0 %24
    %27 = vrot.lane.b32.xlu0 %v21, 42
    %v28 = vpop.permute.xlu0 %27
    %30 = vrot.lane.b32.xlu0 %v21, 58
    %v31 = vpop.permute.xlu0 %30
    %33 = vrot.lane.b32.xlu0 %v21, 30
    %v34 = vpop.permute.xlu0 %33
    %36 = vrot.lane.b32.xlu0 %v21, 46
    %v37 = vpop.permute.xlu0 %36
    %39 = vrot.lane.b32.xlu0 %v21, 62
    %v40 = vpop.permute.xlu0 %39
    %42 = vrot.lane.b32.xlu0 %v21, 34
    %v43 = vpop.permute.xlu0 %42
    %45 = vrot.lane.b32.xlu0 %v21, 50
    %v46 = vpop.permute.xlu0 %45
    %48 = vrot.lane.b32.xlu0 %v21, 66
    %v49 = vpop.permute.xlu0 %48
    %51 = vrot.lane.b32.xlu0 %v21, 38
    %v52 = vpop.permute.xlu0 %51
    %54 = vrot.lane.b32.xlu0 %v21, 54
    %v55 = vpop.permute.xlu0 %54
    %57 = vrot.lane.b32.xlu0 %v21, 70
    %v58 = vpop.permute.xlu0 %57
    %60 = vrot.lane.b32.xlu0 %v21, 74
    %v61 = vpop.permute.xlu0 %60
    %vm63 = vcmask 326656
    %v64 = vsel %vm63, 0.0, %v25
    %vm65 = vcmask 343040
    %v66 = vsel %vm65, %v64, %v28
    %vm67 = vcmask 474112
    %v68 = vsel %vm67, %v66, %v31
    %vm69 = vcmask 490496
    %v70 = vsel %vm69, %v68, %v34
    %vm71 = vcmask 506880
    %v72 = vsel %vm71, %v70, %v37
    %vm73 = vcmask 637952
    %v74 = vsel %vm73, %v72, %v40
    %vm75 = vcmask 654336
    %v76 = vsel %vm75, %v74, %v43
    %vm77 = vcmask 670720
    %v78 = vsel %vm77, %v76, %v46
    %vm79 = vcmask 801792
    %v80 = vsel %vm79, %v78, %v49
    %vm81 = vcmask 818176
    %v82 = vsel %vm81, %v80, %v52
    %vm83 = vcmask 834560
    %v84 = vsel %vm83, %v82, %v55
    %vm85 = vcmask 965632
    %v86 = vsel %vm85, %v84, %v58
    %vm87 = vcmask 982016
    %v88 = vsel %vm87, %v86, %v28
    %vm89 = vcmask 998400
    %v90 = vsel %vm89, %v88, %v31
    %vm91 = vcmask 80896
    %v92 = vsel %vm91, %v31, %v61
    %94 = vrot.lane.b32.xlu0 %v22, 46
    %v95 = vpop.permute.xlu0 %94
    %97 = vrot.lane.b32.xlu0 %v22, 62
    %v98 = vpop.permute.xlu0 %97
    %100 = vrot.lane.b32.xlu0 %v22, 78
    %v101 = vpop.permute.xlu0 %100
    %103 = vrot.lane.b32.xlu0 %v22, 50
    %v104 = vpop.permute.xlu0 %103
    %106 = vrot.lane.b32.xlu0 %v22, 66
    %v107 = vpop.permute.xlu0 %106
    %109 = vrot.lane.b32.xlu0 %v22, 82
    %v110 = vpop.permute.xlu0 %109
    %112 = vrot.lane.b32.xlu0 %v22, 54
    %v113 = vpop.permute.xlu0 %112
    %vm115 = vcmask 15360
    %v116 = vsel %vm115, %v43, %v46
    %vm117 = vcmask 146432
    %v118 = vsel %vm117, %v116, %v49
    %vm119 = vcmask 162816
    %v120 = vsel %vm119, %v118, %v52
    %vm121 = vcmask 179200
    %v122 = vsel %vm121, %v120, %v55
    %vm123 = vcmask 310272
    %v124 = vsel %vm123, %v122, %v58
    %v125 = vsel %vm63, %v124, %v28
    %v126 = vsel %vm65, %v125, %v31
    %v127 = vsel %vm67, %v126, %v61
    %v128 = vsel %vm69, %v127, %v95
    %v129 = vsel %vm71, %v128, %v98
    %v130 = vsel %vm73, %v129, %v101
    %v131 = vsel %vm75, %v130, %v104
    %v132 = vsel %vm77, %v131, %v107
    %v133 = vsel %vm79, %v132, %v110
    %v134 = vsel %vm81, %v133, %v113
    %135 = vrot.lane.b32.xlu0 %v22, 96
    %v136 = vpop.permute.xlu0 %135
    %138 = vrot.lane.b32.xlu0 %v22, 112
    %v139 = vpop.permute.xlu0 %138
    %141 = vrot.lane.b32.xlu0 %v22, 84
    %v142 = vpop.permute.xlu0 %141
    %144 = vrot.lane.b32.xlu0 %v22, 100
    %v145 = vpop.permute.xlu0 %144
    %147 = vrot.lane.b32.xlu0 %v22, 116
    %v148 = vpop.permute.xlu0 %147
    %150 = vrot.lane.b32.xlu0 %v22, 88
    %v151 = vpop.permute.xlu0 %150
    %153 = vrot.lane.b32.xlu0 %v22, 104
    %v154 = vpop.permute.xlu0 %153
    %156 = vrot.lane.b32.xlu0 %v22, 120
    %v157 = vpop.permute.xlu0 %156
    %159 = vrot.lane.b32.xlu0 %v22, 92
    %v160 = vpop.permute.xlu0 %159
    %162 = vrot.lane.b32.xlu0 %v22, 108
    %v163 = vpop.permute.xlu0 %162
    %165 = vrot.lane.b32.xlu0 %v22, 124
    %v166 = vpop.permute.xlu0 %165
    %vm168 = vcmask 130048
    %v169 = vsel %vm168, %v136, %v139
    %v170 = vsel %vm117, %v169, %v142
    %v171 = vsel %vm119, %v170, %v145
    %vm172 = vcmask 293888
    %v173 = vsel %vm172, %v171, %v148
    %v174 = vsel %vm123, %v173, %v151
    %v175 = vsel %vm63, %v174, %v154
    %vm176 = vcmask 457728
    %v177 = vsel %vm176, %v175, %v157
    %v178 = vsel %vm67, %v177, %v160
    %v179 = vsel %vm69, %v178, %v163
    %vm180 = vcmask 621568
    %v181 = vsel %vm180, %v179, %v166
    %v182 = vsel %vm73, %v181, %v136
    %v183 = vsel %vm75, %v182, %v139
    %vm184 = vcmask 785408
    %v185 = vsel %vm184, %v183, %v22
    %v186 = vsel %vm79, %v185, %v145
    %v187 = vsel %vm81, %v186, %v148
    %188 = vrot.lane.b32.xlu0 %v22, 16
    %v189 = vpop.permute.xlu0 %188
    %v191 = vsel %vm115, %v189, 0.0
    %193 = vrot.lane.b32.xlu0 %v134, 12
    %v194 = vpop.permute.xlu0 %193
    %197 = vrot.lane.b32.xlu0 %v187, 114
    %v198 = vpop.permute.xlu0 %197
    %201 = vrot.lane.b32.xlu0 %v191, 102
    %v202 = vpop.permute.xlu0 %201
    %vm204 = vcmask 97280
    %v205 = vsel %vm204, %v92, %v194
    %vm206 = vcmask 932864
    %v207 = vsel %vm206, %v205, %v198
    %v208 = vsel %vm83, %v198, %v202
    %209 = vst [vmem:[#allocation5] sm:$0xff] %v90
    %210 = vst [vmem:[#allocation5 + $0x8] sm:$0xff] %v207
    %211 = vst [vmem:[#allocation5 + $0x10] sm:$0xff] %v208
    %212 = vst.msk [vmem:[#allocation5 + $0x18] sm:$0xff] %vm168, %v202
    // Predicated region
    $region10: #{tpu_custom_call.1} parent=1 // pred_check
      _
    $region11: #{tpu_custom_call.1} parent=1 // pred_check_branch
      %214 = sbr.rel (0) target = $region13
    $region12: #{tpu_custom_call.1} parent=1 // pred_region
      %s216 = ssub.s32 512, 512
      %217 = vsyncadd [#allocation4], %s216
      %s219 = sshll.u32 [#allocation5], 4
      %s220 = int_to_ptr.vmem [resolvable:$true] %s219
      %222 = dma.vmem_to_hbm [thread:$0]  %s220, 512, %s1, [#allocation4]
    $region13: #{tpu_custom_call.1} parent=1 // pred_fallthru
      _
    // Predicated region
    $region14: #{tpu_custom_call.1} parent=1 // pred_check
      _
    $region15: #{tpu_custom_call.1} parent=1 // pred_check_branch
      %224 = sbr.rel (0) target = $region17
    $region16: #{tpu_custom_call.1} parent=1 // pred_region
      %225 = dma.done [#allocation4], 512
    $region17: #{tpu_custom_call.1} parent=1 // pred_fallthru
      _
    %226 = vsyncpa [#allocation3], 1
    %227 = vsyncpa [#allocation4], 1

</llo_original>
